<compile_context>
chip_gen: v7x
topology: tpu7x:2x2x1
jax: 0.10.0
libtpu: 0.0.40
codegen_flags: <defaults>
</compile_context>

<pallas_src>
import functools
import math

import jax
import jax.numpy as jnp
from jax.experimental import pallas as pl
from jax.experimental.pallas import tpu as pltpu

LANE = 128   # vreg lane width
SUB = 8      # vreg sublane width


def _round_up(x, m):
    return (x + m - 1) // m * m


# ----------------------------------------------------------------------------
# Kernel
# ----------------------------------------------------------------------------
def qnet_kernel(x_ref, p_ref, out_ref, *, offs, row_lens):
    """One batch tile of the (dueling-folded) Q-network forward pass.

    x_ref:   (block_m, S_pad)       input states (features zero-padded to S_pad)
    p_ref:   (P_ROWS, W)            packed weights/biases, VMEM-resident
    out_ref: (block_m, W)           lane-dense Q-values (cols A..W-1 are zero)
    """
    o_w1, o_b1, o_w2, o_b2, o_wq, o_bq = offs
    r_w1, r_w2, r_wq = row_lens      # S_pad, W, W

    x = x_ref[...]

    # fc1 + relu   (S_pad -> W, cols H1..W-1 are zero)
    w1 = p_ref[o_w1:o_w1 + r_w1, :]
    b1 = p_ref[o_b1:o_b1 + 1, :]
    h1 = jnp.maximum(
        jnp.dot(x, w1, preferred_element_type=jnp.float32) + b1, 0.0)

    # fc2 + relu   (W -> W, cols H2..W-1 are zero)
    w2 = p_ref[o_w2:o_w2 + r_w2, :]
    b2 = p_ref[o_b2:o_b2 + 1, :]
    h2 = jnp.maximum(
        jnp.dot(h1, w2, preferred_element_type=jnp.float32) + b2, 0.0)

    # fused value+advantage head with the dueling combine already folded in:
    # single matmul, full-lane store.  Cols A..W-1 are zero and sliced off
    # by the wrapper.
    wq = p_ref[o_wq:o_wq + r_wq, :]
    bq = p_ref[o_bq:o_bq + 1, :]
    out_ref[...] = (jnp.dot(h2, wq, preferred_element_type=jnp.float32)
                    + bq).astype(out_ref.dtype)


# ----------------------------------------------------------------------------
# Packing
# ----------------------------------------------------------------------------
def pack_params(params):
    """Pack pre-transposed weights/biases into one (rows, W) f32 buffer.

    * The dueling combine Q = V + (A - mean(A)) is folded into the fused head
      weights via the linear map M (shape (1+A, A)).
    * Every section is zero-padded to the common lane width W (multiple of 128)
      and to sublane-aligned (and, for fc2/head, full-W) row counts so the
      kernel only performs full-vreg loads and full-lane matmuls.
    """
    w1, b1 = params["w1"], params["b1"]          # (S, H1),  (1, H1)
    w2, b2 = params["w2"], params["b2"]          # (H1, H2), (1, H2)
    w3, b3 = params["w3"], params["b3"]          # (H2, 1),  (1, 1)
    w4, b4 = params["w4"], params["b4"]          # (H2, A),  (1, A)

    S, H1 = w1.shape
    H2 = w2.shape[1]
    A = w4.shape[1]

    # Dueling fold:  Q = [V | A] @ M,  M[0,:]=1,  M[1+k, j] = delta_kj - 1/A.
    M = jnp.concatenate(
        [jnp.ones((1, A), jnp.float32),
         jnp.eye(A, dtype=jnp.float32) - 1.0 / A], axis=0)        # (1+A, A)
    w34 = jnp.concatenate([w3, w4], axis=1)                        # (H2, 1+A)
    b34 = jnp.concatenate([b3, b4], axis=1)                        # (1, 1+A)
    wq = w34 @ M                                                   # (H2, A)
    bq = b34 @ M                                                   # (1, A)

    S_pad = _round_up(S, SUB)
    width = _round_up(max(H1, H2, A), LANE)

    # (tensor, padded_row_count) — row counts chosen so every in-kernel slice
    # is 8-aligned and the fc2/head contraction dims match the full-W h1/h2.
    sections = [
        (w1, S_pad), (b1, SUB),
        (w2, width), (b2, SUB),
        (wq, width), (bq, SUB),
    ]
    offs, blocks, rows = [], [], 0
    for s, rpad in sections:
        offs.append(rows)
        blk = jnp.zeros((rpad, width), jnp.float32)
        blk = blk.at[:s.shape[0], :s.shape[1]].set(s.astype(jnp.float32))
        blocks.append(blk)
        rows += rpad
    packed = jnp.concatenate(blocks, axis=0)     # (rows, width)
    dims = (S, S_pad, H1, H2, A, width)
    return packed, tuple(offs), dims


# ----------------------------------------------------------------------------
# Wrapper
# ----------------------------------------------------------------------------
def _pick_block_m(batch, cap=2048):
    """Batch tile size per TPU generation.

    v5e / v6e (single TensorCore): one tile as big as possible (grid=1 up to
    `cap`) — per-grid-step overhead dominates the tiny per-tile compute.
    v7x (2 TCs): >=2 balanced 'parallel' steps so megacore shards the batch
    axis across both cores (VMEM use here is tiny, far under the 32 MiB
    scoped / 64 MiB physical per-TC limit).
    """
    padded = _round_up(max(batch, 1), SUB)
    kind = ""
    try:
        kind = jax.devices()[0].device_kind.lower()
    except Exception:
        pass
    two_tc = "v7" in kind
    if two_tc and padded > SUB:
        block_m = _round_up((padded + 1) // 2, SUB)
    else:
        block_m = padded
    return min(block_m, cap)


@functools.partial(jax.jit, static_argnames=("dims", "offs", "block_m"))
def _qnetwork_forward(x, packed, *, dims, offs, block_m):
    S, S_pad, H1, H2, A, width = dims
    batch = x.shape[0]

    padded = _round_up(batch, block_m)
    if padded != batch or S_pad != S:
        x = jnp.pad(x, ((0, padded - batch), (0, S_pad - S)))
    grid = (padded // block_m,)

    out = pl.pallas_call(
        functools.partial(qnet_kernel, offs=offs,
                          row_lens=(S_pad, width, width)),
        out_shape=jax.ShapeDtypeStruct((padded, width), jnp.float32),
        grid_spec=pltpu.PrefetchScalarGridSpec(
            num_scalar_prefetch=0,
            grid=grid,
            in_specs=[
                # batch-tiled activations
                pl.BlockSpec((block_m, S_pad), lambda i: (i, 0)),
                # packed weights: constant index_map -> one DMA, VMEM-resident
                pl.BlockSpec(packed.shape, lambda i: (0, 0)),
            ],
            # lane-dense output tile (width is a multiple of 128)
            out_specs=pl.BlockSpec((block_m, width), lambda i: (i, 0)),
        ),
        compiler_params=pltpu.CompilerParams(
            dimension_semantics=("parallel",)),   # megacore-shard batch (v7x)
    )(x, packed)
    return out[:batch, :A]


def qnetwork_forward(x, packed, *, dims, offs, block_m=None):
    if block_m is None:
        block_m = _pick_block_m(x.shape[0])
    return _qnetwork_forward(x, packed, dims=dims, offs=offs, block_m=block_m)


# ----------------------------------------------------------------------------
# Init + reference
# ----------------------------------------------------------------------------
def init_linear(key, fan_in, fan_out):
    """Mirror torch.nn.Linear default init U(-1/sqrt(fan_in), 1/sqrt(fan_in))."""
    kw, kb = jax.random.split(key)
    bound = 1.0 / math.sqrt(fan_in)
    w = jax.random.uniform(kw, (fan_in, fan_out), jnp.float32, -bound, bound)
    b = jax.random.uniform(kb, (1, fan_out), jnp.float32, -bound, bound)
    return w, b


def make_params(key, state_size, action_size):
    k1, k2, k3, k4 = jax.random.split(key, 4)
    w1, b1 = init_linear(k1, state_size, 4 * state_size)
    w2, b2 = init_linear(k2, 4 * state_size, 4 * action_size)
    w3, b3 = init_linear(k3, 4 * action_size, 1)
    w4, b4 = init_linear(k4, 4 * action_size, action_size)
    return dict(w1=w1, b1=b1, w2=w2, b2=b2, w3=w3, b3=b3, w4=w4, b4=b4)


def reference_forward(x, p):
    h1 = jax.nn.relu(x @ p["w1"] + p["b1"])
    h2 = jax.nn.relu(h1 @ p["w2"] + p["b2"])
    a = h2 @ p["w4"] + p["b4"]
    v = h2 @ p["w3"] + p["b3"]
    return v + (a - a.mean(axis=1, keepdims=True))


if __name__ == "__main__":
    state_size, action_size = 32, 8
    key = jax.random.PRNGKey(0)
    kx1, kx2, kp = jax.random.split(key, 3)

    params = make_params(kp, state_size, action_size)
    packed, offs, dims = pack_params(params)

    # Small batch (single grid step, whole-batch tile).
    x_small = jax.random.normal(kx1, (8, state_size), jnp.float32)
    out_small = qnetwork_forward(x_small, packed, dims=dims, offs=offs)
    jax.block_until_ready(out_small)
    ref_small = reference_forward(x_small, params)
    assert out_small.shape == (8, action_size)
    assert jnp.allclose(out_small, ref_small, atol=1e-4, rtol=1e-4), \
        "small-batch mismatch vs JAX reference"

    # Replay-style batch (exercises padding + batch grid + resident weights).
    x_big = jax.random.normal(kx2, (200, state_size), jnp.float32)
    out_big = qnetwork_forward(x_big, packed, dims=dims, offs=offs)
    jax.block_until_ready(out_big)
    ref_big = reference_forward(x_big, params)
    assert out_big.shape == (200, action_size)
    assert jnp.allclose(out_big, ref_big, atol=1e-4, rtol=1e-4), \
        "batched mismatch vs JAX reference"

    print("KERNEL_OK")
</pallas_src>

<mosaic_0001>
module attributes {stable_mosaic.version = 11 : i64} {
  func.func @qnet_kernel(%arg0: i32, %arg1: memref<8x32xf32, #tpu.memory_space<vmem>>, %arg2: memref<312x128xf32, #tpu.memory_space<vmem>>, %arg3: memref<8x128xf32, #tpu.memory_space<vmem>>) attributes {dimension_semantics = [#tpu.dimension_semantics<parallel>], iteration_bounds = array<i64: 1>, scalar_prefetch = 0 : i64, scratch_operands = 0 : i64, tpu.core_type = #tpu.core_type<tc>, window_params = [{transform_indices = @transform_0, window_bounds = array<i64: 8, 32>}, {pipeline_mode = #tpu.pipeline_mode<synchronous>, transform_indices = @transform_1, window_bounds = array<i64: 312, 128>}, {transform_indices = @transform_2, window_bounds = array<i64: 8, 128>}]} {
    %c0 = arith.constant 0 : index
    %c0_0 = arith.constant 0 : index
    %0 = vector.load %arg1[%c0, %c0_0] : memref<8x32xf32, #tpu.memory_space<vmem>>, vector<8x32xf32>
    %c0_1 = arith.constant 0 : index
    %c0_2 = arith.constant 0 : index
    %1 = vector.load %arg2[%c0_1, %c0_2] : memref<312x128xf32, #tpu.memory_space<vmem>>, vector<32x128xf32>
    %c32 = arith.constant 32 : index
    %c0_3 = arith.constant 0 : index
    %2 = vector.load %arg2[%c32, %c0_3] : memref<312x128xf32, #tpu.memory_space<vmem>>, vector<1x128xf32>
    %cst = arith.constant dense<0.000000e+00> : vector<8x128xf32>
    %3 = tpu.matmul %0, %1, %cst {dimension_numbers = #tpu.dot_dimension_numbers<[1], [0], [0], [1], [0, 0, 1, 1], [], []>} : vector<8x32xf32>, vector<32x128xf32>, vector<8x128xf32> -> vector<8x128xf32>
    %4 = vector.broadcast %2 : vector<1x128xf32> to vector<8x128xf32>
    %5 = arith.addf %3, %4 : vector<8x128xf32>
    %cst_4 = arith.constant 0.000000e+00 : f32
    %6 = vector.broadcast %cst_4 : f32 to vector<8x128xf32>
    %7 = arith.maximumf %5, %6 : vector<8x128xf32>
    %c40 = arith.constant 40 : index
    %c0_5 = arith.constant 0 : index
    %8 = vector.load %arg2[%c40, %c0_5] : memref<312x128xf32, #tpu.memory_space<vmem>>, vector<128x128xf32>
    %c168 = arith.constant 168 : index
    %c0_6 = arith.constant 0 : index
    %9 = vector.load %arg2[%c168, %c0_6] : memref<312x128xf32, #tpu.memory_space<vmem>>, vector<1x128xf32>
    %cst_7 = arith.constant dense<0.000000e+00> : vector<8x128xf32>
    %10 = tpu.matmul %7, %8, %cst_7 {dimension_numbers = #tpu.dot_dimension_numbers<[1], [0], [0], [1], [0, 0, 1, 1], [], []>} : vector<8x128xf32>, vector<128x128xf32>, vector<8x128xf32> -> vector<8x128xf32>
    %11 = vector.broadcast %9 : vector<1x128xf32> to vector<8x128xf32>
    %12 = arith.addf %10, %11 : vector<8x128xf32>
    %cst_8 = arith.constant 0.000000e+00 : f32
    %13 = vector.broadcast %cst_8 : f32 to vector<8x128xf32>
    %14 = arith.maximumf %12, %13 : vector<8x128xf32>
    %c176 = arith.constant 176 : index
    %c0_9 = arith.constant 0 : index
    %15 = vector.load %arg2[%c176, %c0_9] : memref<312x128xf32, #tpu.memory_space<vmem>>, vector<128x128xf32>
    %c304 = arith.constant 304 : index
    %c0_10 = arith.constant 0 : index
    %16 = vector.load %arg2[%c304, %c0_10] : memref<312x128xf32, #tpu.memory_space<vmem>>, vector<1x128xf32>
    %cst_11 = arith.constant dense<0.000000e+00> : vector<8x128xf32>
    %17 = tpu.matmul %14, %15, %cst_11 {dimension_numbers = #tpu.dot_dimension_numbers<[1], [0], [0], [1], [0, 0, 1, 1], [], []>} : vector<8x128xf32>, vector<128x128xf32>, vector<8x128xf32> -> vector<8x128xf32>
    %18 = vector.broadcast %16 : vector<1x128xf32> to vector<8x128xf32>
    %19 = arith.addf %17, %18 : vector<8x128xf32>
    %c0_12 = arith.constant 0 : index
    %c0_13 = arith.constant 0 : index
    %20 = vector.load %arg3[%c0_12, %c0_13] : memref<8x128xf32, #tpu.memory_space<vmem>>, vector<8x128xf32>
    tpu.vector_store %arg3[%c0_12, %c0_13], %19 {strides = array<i32>} : memref<8x128xf32, #tpu.memory_space<vmem>>, vector<8x128xf32>,
    return
  }
  func.func @transform_0(%arg0: i32) -> (i32, i32) {
    %c0_i32 = arith.constant 0 : i32
    %c0_i32_0 = arith.constant 0 : i32
    return %arg0, %c0_i32 : i32, i32
  }
  func.func @transform_1(%arg0: i32) -> (i32, i32) {
    %c0_i32 = arith.constant 0 : i32
    %c0_i32_0 = arith.constant 0 : i32
    %c0_i32_1 = arith.constant 0 : i32
    return %c0_i32, %c0_i32_0 : i32, i32
  }
  func.func @transform_2(%arg0: i32) -> (i32, i32) {
    %c0_i32 = arith.constant 0 : i32
    %c0_i32_0 = arith.constant 0 : i32
    return %arg0, %c0_i32 : i32, i32
  }
}

</mosaic_0001>

<llo_original>
// kernel: _qnetwork_forward.1
$region0: #{_qnetwork_forward.1}
  #allocation0 [shape = 'u32[]', space=smem, size = 0x4, offset = 0x4, fixed_abs, tag = 'smem constant byte address 0x4 - core index']
  #allocation1 [shape = 'u32[144,128]{1,0:T(1,128)}', space=vmem, size = 0x12000, scoped, tag = 'internal scratch']
  %s0 = inlined_call_operand.hbm [shape: f32[8,32], index: 0, kind: input, shape index: {}]
  %s1 = inlined_call_operand.hbm [shape: f32[312,128], index: 1, kind: input, shape index: {}]
  %s2 = inlined_call_operand.hbm [shape: f32[8,128], index: 2, kind: output, shape index: {}]
  %s3 = sld [smem:[#allocation0]]
  $region26: #{_qnetwork_forward.1} parent=0
    _
  %s5 = ssub.s32 1, %s3
  %s6 = scalar_select 0, %s5, %s3
  $region1: #{_qnetwork_forward.1} parent=0
    #allocation2 [shape = 'u8[4096]{0}', space=vmem, size = 0x1000, scoped, tag = 'input window, operand 0, single buffered']
    #allocation3 [shape = 's32[1]{0}', space=sflag, size = 0x4, scoped, tag = 'scoped memory for _qnetwork_forward.1']
    #allocation4 [shape = 's32[1]{0}', space=sflag, size = 0x4, scoped, tag = 'scoped memory for _qnetwork_forward.1']
    #allocation5 [shape = 'u8[159744]{0}', space=vmem, size = 0x27000, scoped, tag = 'input window, operand 1, single buffered']
    #allocation6 [shape = 's32[1]{0}', space=sflag, size = 0x4, scoped, tag = 'scoped memory for _qnetwork_forward.1']
    #allocation7 [shape = 'u8[4096]{0}', space=vmem, size = 0x1000, scoped, tag = 'output window, operand 0, single buffered']
    %7 = vsyncpa [#allocation3], 0
    %8 = vsyncpa [#allocation6], 0
    %9 = vsyncpa [#allocation4], 0
    // Predicated region
    $region2: #{_qnetwork_forward.1} parent=1 // pred_check
      _
    $region3: #{_qnetwork_forward.1} parent=1 // pred_check_branch
      %11 = sbr.rel (0) target = $region5
    $region4: #{_qnetwork_forward.1} parent=1 // pred_region
      %s13 = ssub.s32 128, 128
      %14 = vsyncadd [#allocation3], %s13
      %s16 = sshll.u32 [#allocation2], 4
      %s17 = int_to_ptr.vmem [resolvable:$true] %s16
      %19 = dma.hbm_to_vmem [thread:$0]  %s0, 128, %s17, [#allocation3]
    $region5: #{_qnetwork_forward.1} parent=1 // pred_fallthru
      _
    // Predicated region
    $region6: #{_qnetwork_forward.1} parent=1 // pred_check
      _
    $region7: #{_qnetwork_forward.1} parent=1 // pred_check_branch
      %21 = sbr.rel (0) target = $region9
    $region8: #{_qnetwork_forward.1} parent=1 // pred_region
      %s23 = ssub.s32 4992, 4992
      %24 = vsyncadd [#allocation6], %s23
      %s25 = sshll.u32 [#allocation5], 4
      %s26 = int_to_ptr.vmem [resolvable:$true] %s25
      %31 = dma.hbm_to_vmem [thread:$0]  %s1, 4992, %s26, [#allocation6], 128, 128, 8
    $region9: #{_qnetwork_forward.1} parent=1 // pred_fallthru
      _
    // Predicated region
    $region10: #{_qnetwork_forward.1} parent=1 // pred_check
      _
    $region11: #{_qnetwork_forward.1} parent=1 // pred_check_branch
      %33 = sbr.rel (0) target = $region13
    $region12: #{_qnetwork_forward.1} parent=1 // pred_region
      %34 = dma.done [#allocation3], 128
    $region13: #{_qnetwork_forward.1} parent=1 // pred_fallthru
      _
    // Predicated region
    $region14: #{_qnetwork_forward.1} parent=1 // pred_check
      _
    $region15: #{_qnetwork_forward.1} parent=1 // pred_check_branch
      %36 = sbr.rel (0) target = $region17
    $region16: #{_qnetwork_forward.1} parent=1 // pred_region
      %37 = dma.done [#allocation6], 4992
    $region17: #{_qnetwork_forward.1} parent=1 // pred_fallthru
      _
    %v38 = vld [vmem:[#allocation2] sm:$0xff]
    %v39 = vld [vmem:[#allocation5] sm:$0xff]
    %v40 = vld [vmem:[#allocation5 + $0x8] sm:$0xff]
    %v41 = vld [vmem:[#allocation5 + $0x10] sm:$0xff]
    %v42 = vld [vmem:[#allocation5 + $0x18] sm:$0xff]
    %v43 = vld [vmem:[#allocation5 + $0x20] sm:$0x1]
    %v44 = vlaneseq
    %v45 = vshrl.u32 %v44, 7
    %v46 = vsub.s32 0, %v45
    %v47 = vrot.slane %v43, %v46
    %vm48 = vcmask 261120
    %v50 = vsel %vm48, %v38, 0
    %52 = vmatprep.subr.mxu0 0.0
    %53 = vmatpush1.msra.mxu0 %v39
    %54 = vmatprep.subr.mxu0 0.0
    %55 = vmatpush1.msra.mxu0 %v40
    %56 = vmatprep.subr.mxu0 0.0
    %57 = vmatpush1.msra.mxu0 %v41
    %58 = vmatprep.subr.mxu0 0.0
    %59 = vmatpush1.msra.mxu0 %v42
    %60 = vmatprep.subr.mxu0 0.0
    %61 = vmatpush1.msra.mxu0 0.0
    %62 = vmatprep.subr.mxu0 0.0
    %63 = vmatpush1.msra.mxu0 0.0
    %64 = vmatprep.subr.mxu0 0.0
    %65 = vmatpush1.msra.mxu0 0.0
    %66 = vmatprep.subr.mxu0 0.0
    %67 = vmatpush1.msra.mxu0 0.0
    %68 = vmatprep.subr.mxu0 0.0
    %69 = vmatpush1.msra.mxu0 0.0
    %70 = vmatprep.subr.mxu0 0.0
    %71 = vmatpush1.msra.mxu0 0.0
    %72 = vmatprep.subr.mxu0 0.0
    %73 = vmatpush1.msra.mxu0 0.0
    %74 = vmatprep.subr.mxu0 0.0
    %75 = vmatpush1.msra.mxu0 0.0
    %76 = vmatprep.subr.mxu0 0.0
    %77 = vmatpush1.msra.mxu0 0.0
    %78 = vmatprep.subr.mxu0 0.0
    %79 = vmatpush1.msra.mxu0 0.0
    %80 = vmatprep.subr.mxu0 0.0
    %81 = vmatpush1.msra.mxu0 0.0
    %82 = vmatprep.subr.mxu0 0.0
    %83 = vmatpush1.msra.mxu0 0.0
    %84 = vmatprep.subr.mxu0 0.0
    %85 = vmatpush1.msra.mxu0 0.0
    %86 = vmatprep.subr.mxu0 0.0
    %87 = vmatpush1.msra.mxu0 0.0
    %88 = vmatprep.subr.mxu0 0.0
    %89 = vmatpush1.msra.mxu0 0.0
    %90 = vmatprep.subr.mxu0 0.0
    %91 = vmatpush1.msra.mxu0 0.0
    %92 = vmatprep.subr.mxu0 0.0
    %93 = vmatpush1.msra.mxu0 0.0
    %94 = vmatprep.subr.mxu0 0.0
    %95 = vmatpush1.msra.mxu0 0.0
    %96 = vmatprep.subr.mxu0 0.0
    %97 = vmatpush1.msra.mxu0 0.0
    %98 = vmatprep.subr.mxu0 0.0
    %99 = vmatpush1.msra.mxu0 0.0
    %100 = vmatprep.subr.mxu0 0.0
    %101 = vmatpush1.msra.mxu0 0.0
    %102 = vmatprep.subr.mxu0 0.0
    %103 = vmatpush1.msra.mxu0 0.0
    %104 = vmatprep.subr.mxu0 0.0
    %105 = vmatpush1.msra.mxu0 0.0
    %106 = vmatprep.subr.mxu0 0.0
    %107 = vmatpush1.msra.mxu0 0.0
    %108 = vmatprep.subr.mxu0 0.0
    %109 = vmatpush1.msra.mxu0 0.0
    %110 = vmatprep.subr.mxu0 0.0
    %111 = vmatpush1.msra.mxu0 0.0
    %112 = vmatprep.subr.mxu0 0.0
    %113 = vmatpush1.msra.mxu0 0.0
    %114 = vmatprep.subr.mxu0 0.0
    %115 = vmatpush1.msra.mxu0 0.0
    %116 = vmatprep.mubr.f32.mxu0 0.0
    %117 = vmatmul.mubr.f32.gmra.mrb[0].mxu0 %v50
    %v118 = vpop.f32.mrb[0].mxu0
    %v119 = vadd.f32 %v47, %v118
    %v120 = vpop.f32.mrb[0].mxu0
    %121 = vdwg.mxu0
    %v122 = vmax.f32 %v119, 0.0
    %v123 = vld [vmem:[#allocation5 + $0x28] sm:$0xff]
    %v124 = vld [vmem:[#allocation5 + $0x30] sm:$0xff]
    %v125 = vld [vmem:[#allocation5 + $0x38] sm:$0xff]
    %v126 = vld [vmem:[#allocation5 + $0x40] sm:$0xff]
    %v127 = vld [vmem:[#allocation5 + $0x48] sm:$0xff]
    %v128 = vld [vmem:[#allocation5 + $0x50] sm:$0xff]
    %v129 = vld [vmem:[#allocation5 + $0x58] sm:$0xff]
    %v130 = vld [vmem:[#allocation5 + $0x60] sm:$0xff]
    %v131 = vld [vmem:[#allocation5 + $0x68] sm:$0xff]
    %v132 = vld [vmem:[#allocation5 + $0x70] sm:$0xff]
    %v133 = vld [vmem:[#allocation5 + $0x78] sm:$0xff]
    %v134 = vld [vmem:[#allocation5 + $0x80] sm:$0xff]
    %v135 = vld [vmem:[#allocation5 + $0x88] sm:$0xff]
    %v136 = vld [vmem:[#allocation5 + $0x90] sm:$0xff]
    %v137 = vld [vmem:[#allocation5 + $0x98] sm:$0xff]
    %v138 = vld [vmem:[#allocation5 + $0xa0] sm:$0xff]
    %v139 = vld [vmem:[#allocation5 + $0xa8] sm:$0x1]
    %v140 = vlaneseq
    %v141 = vshrl.u32 %v140, 7
    %v142 = vsub.s32 0, %v141
    %v143 = vrot.slane %v139, %v142
    %144 = vmatprep.subr.mxu0 0.0
    %145 = vmatpush1.msra.mxu0 %v123
    %146 = vmatprep.subr.mxu0 0.0
    %147 = vmatpush1.msra.mxu0 %v124
    %148 = vmatprep.subr.mxu0 0.0
    %149 = vmatpush1.msra.mxu0 %v125
    %150 = vmatprep.subr.mxu0 0.0
    %151 = vmatpush1.msra.mxu0 %v126
    %152 = vmatprep.subr.mxu0 0.0
    %153 = vmatpush1.msra.mxu0 %v127
    %154 = vmatprep.subr.mxu0 0.0
    %155 = vmatpush1.msra.mxu0 %v128
    %156 = vmatprep.subr.mxu0 0.0
    %157 = vmatpush1.msra.mxu0 %v129
    %158 = vmatprep.subr.mxu0 0.0
    %159 = vmatpush1.msra.mxu0 %v130
    %160 = vmatprep.subr.mxu0 0.0
    %161 = vmatpush1.msra.mxu0 %v131
    %162 = vmatprep.subr.mxu0 0.0
    %163 = vmatpush1.msra.mxu0 %v132
    %164 = vmatprep.subr.mxu0 0.0
    %165 = vmatpush1.msra.mxu0 %v133
    %166 = vmatprep.subr.mxu0 0.0
    %167 = vmatpush1.msra.mxu0 %v134
    %168 = vmatprep.subr.mxu0 0.0
    %169 = vmatpush1.msra.mxu0 %v135
    %170 = vmatprep.subr.mxu0 0.0
    %171 = vmatpush1.msra.mxu0 %v136
    %172 = vmatprep.subr.mxu0 0.0
    %173 = vmatpush1.msra.mxu0 %v137
    %174 = vmatprep.subr.mxu0 0.0
    %175 = vmatpush1.msra.mxu0 %v138
    %176 = vmatprep.subr.mxu0 0.0
    %177 = vmatpush1.msra.mxu0 0.0
    %178 = vmatprep.subr.mxu0 0.0
    %179 = vmatpush1.msra.mxu0 0.0
    %180 = vmatprep.subr.mxu0 0.0
    %181 = vmatpush1.msra.mxu0 0.0
    %182 = vmatprep.subr.mxu0 0.0
    %183 = vmatpush1.msra.mxu0 0.0
    %184 = vmatprep.subr.mxu0 0.0
    %185 = vmatpush1.msra.mxu0 0.0
    %186 = vmatprep.subr.mxu0 0.0
    %187 = vmatpush1.msra.mxu0 0.0
    %188 = vmatprep.subr.mxu0 0.0
    %189 = vmatpush1.msra.mxu0 0.0
    %190 = vmatprep.subr.mxu0 0.0
    %191 = vmatpush1.msra.mxu0 0.0
    %192 = vmatprep.subr.mxu0 0.0
    %193 = vmatpush1.msra.mxu0 0.0
    %194 = vmatprep.subr.mxu0 0.0
    %195 = vmatpush1.msra.mxu0 0.0
    %196 = vmatprep.subr.mxu0 0.0
    %197 = vmatpush1.msra.mxu0 0.0
    %198 = vmatprep.subr.mxu0 0.0
    %199 = vmatpush1.msra.mxu0 0.0
    %200 = vmatprep.subr.mxu0 0.0
    %201 = vmatpush1.msra.mxu0 0.0
    %202 = vmatprep.subr.mxu0 0.0
    %203 = vmatpush1.msra.mxu0 0.0
    %204 = vmatprep.subr.mxu0 0.0
    %205 = vmatpush1.msra.mxu0 0.0
    %206 = vmatprep.subr.mxu0 0.0
    %207 = vmatpush1.msra.mxu0 0.0
    %208 = vmatprep.mubr.f32.mxu0 0.0
    %209 = vmatmul.mubr.f32.gmra.mrb[0].mxu0 %v122
    %v210 = vpop.f32.mrb[0].mxu0
    %v211 = vadd.f32 %v143, %v210
    %v212 = vpop.f32.mrb[0].mxu0
    %213 = vdwg.mxu0
    %v214 = vmax.f32 %v211, 0.0
    %v215 = vld [vmem:[#allocation5 + $0xb0] sm:$0xff]
    %v216 = vld [vmem:[#allocation5 + $0xb8] sm:$0xff]
    %v217 = vld [vmem:[#allocation5 + $0xc0] sm:$0xff]
    %v218 = vld [vmem:[#allocation5 + $0xc8] sm:$0xff]
    %v219 = vld [vmem:[#allocation5 + $0xd0] sm:$0xff]
    %v220 = vld [vmem:[#allocation5 + $0xd8] sm:$0xff]
    %v221 = vld [vmem:[#allocation5 + $0xe0] sm:$0xff]
    %v222 = vld [vmem:[#allocation5 + $0xe8] sm:$0xff]
    %v223 = vld [vmem:[#allocation5 + $0xf0] sm:$0xff]
    %v224 = vld [vmem:[#allocation5 + $0xf8] sm:$0xff]
    %v225 = vld [vmem:[#allocation5 + $0x100] sm:$0xff]
    %v226 = vld [vmem:[#allocation5 + $0x108] sm:$0xff]
    %v227 = vld [vmem:[#allocation5 + $0x110] sm:$0xff]
    %v228 = vld [vmem:[#allocation5 + $0x118] sm:$0xff]
    %v229 = vld [vmem:[#allocation5 + $0x120] sm:$0xff]
    %v230 = vld [vmem:[#allocation5 + $0x128] sm:$0xff]
    %v231 = vld [vmem:[#allocation5 + $0x130] sm:$0x1]
    %v232 = vlaneseq
    %v233 = vshrl.u32 %v232, 7
    %v234 = vsub.s32 0, %v233
    %v235 = vrot.slane %v231, %v234
    %236 = vmatprep.subr.mxu0 0.0
    %237 = vmatpush1.msra.mxu0 %v215
    %238 = vmatprep.subr.mxu0 0.0
    %239 = vmatpush1.msra.mxu0 %v216
    %240 = vmatprep.subr.mxu0 0.0
    %241 = vmatpush1.msra.mxu0 %v217
    %242 = vmatprep.subr.mxu0 0.0
    %243 = vmatpush1.msra.mxu0 %v218
    %244 = vmatprep.subr.mxu0 0.0
    %245 = vmatpush1.msra.mxu0 %v219
    %246 = vmatprep.subr.mxu0 0.0
    %247 = vmatpush1.msra.mxu0 %v220
    %248 = vmatprep.subr.mxu0 0.0
    %249 = vmatpush1.msra.mxu0 %v221
    %250 = vmatprep.subr.mxu0 0.0
    %251 = vmatpush1.msra.mxu0 %v222
    %252 = vmatprep.subr.mxu0 0.0
    %253 = vmatpush1.msra.mxu0 %v223
    %254 = vmatprep.subr.mxu0 0.0
    %255 = vmatpush1.msra.mxu0 %v224
    %256 = vmatprep.subr.mxu0 0.0
    %257 = vmatpush1.msra.mxu0 %v225
    %258 = vmatprep.subr.mxu0 0.0
    %259 = vmatpush1.msra.mxu0 %v226
    %260 = vmatprep.subr.mxu0 0.0
    %261 = vmatpush1.msra.mxu0 %v227
    %262 = vmatprep.subr.mxu0 0.0
    %263 = vmatpush1.msra.mxu0 %v228
    %264 = vmatprep.subr.mxu0 0.0
    %265 = vmatpush1.msra.mxu0 %v229
    %266 = vmatprep.subr.mxu0 0.0
    %267 = vmatpush1.msra.mxu0 %v230
    %268 = vmatprep.subr.mxu0 0.0
    %269 = vmatpush1.msra.mxu0 0.0
    %270 = vmatprep.subr.mxu0 0.0
    %271 = vmatpush1.msra.mxu0 0.0
    %272 = vmatprep.subr.mxu0 0.0
    %273 = vmatpush1.msra.mxu0 0.0
    %274 = vmatprep.subr.mxu0 0.0
    %275 = vmatpush1.msra.mxu0 0.0
    %276 = vmatprep.subr.mxu0 0.0
    %277 = vmatpush1.msra.mxu0 0.0
    %278 = vmatprep.subr.mxu0 0.0
    %279 = vmatpush1.msra.mxu0 0.0
    %280 = vmatprep.subr.mxu0 0.0
    %281 = vmatpush1.msra.mxu0 0.0
    %282 = vmatprep.subr.mxu0 0.0
    %283 = vmatpush1.msra.mxu0 0.0
    %284 = vmatprep.subr.mxu0 0.0
    %285 = vmatpush1.msra.mxu0 0.0
    %286 = vmatprep.subr.mxu0 0.0
    %287 = vmatpush1.msra.mxu0 0.0
    %288 = vmatprep.subr.mxu0 0.0
    %289 = vmatpush1.msra.mxu0 0.0
    %290 = vmatprep.subr.mxu0 0.0
    %291 = vmatpush1.msra.mxu0 0.0
    %292 = vmatprep.subr.mxu0 0.0
    %293 = vmatpush1.msra.mxu0 0.0
    %294 = vmatprep.subr.mxu0 0.0
    %295 = vmatpush1.msra.mxu0 0.0
    %296 = vmatprep.subr.mxu0 0.0
    %297 = vmatpush1.msra.mxu0 0.0
    %298 = vmatprep.subr.mxu0 0.0
    %299 = vmatpush1.msra.mxu0 0.0
    %300 = vmatprep.mubr.f32.mxu0 0.0
    %301 = vmatmul.mubr.f32.gmra.mrb[0].mxu0 %v214
    %v302 = vpop.f32.mrb[0].mxu0
    %v303 = vadd.f32 %v235, %v302
    %v304 = vpop.f32.mrb[0].mxu0
    %305 = vdwg.mxu0
    %306 = vst [vmem:[#allocation7] sm:$0xff] %v303
    // Predicated region
    $region18: #{_qnetwork_forward.1} parent=1 // pred_check
      _
    $region19: #{_qnetwork_forward.1} parent=1 // pred_check_branch
      %308 = sbr.rel (0) target = $region21
    $region20: #{_qnetwork_forward.1} parent=1 // pred_region
      %s310 = ssub.s32 128, 128
      %311 = vsyncadd [#allocation4], %s310
      %s313 = sshll.u32 [#allocation7], 4
      %s314 = int_to_ptr.vmem [resolvable:$true] %s313
      %316 = dma.vmem_to_hbm [thread:$0]  %s314, 128, %s2, [#allocation4]
    $region21: #{_qnetwork_forward.1} parent=1 // pred_fallthru
      _
    // Predicated region
    $region22: #{_qnetwork_forward.1} parent=1 // pred_check
      _
    $region23: #{_qnetwork_forward.1} parent=1 // pred_check_branch
      %318 = sbr.rel (0) target = $region25
    $region24: #{_qnetwork_forward.1} parent=1 // pred_region
      %319 = dma.done [#allocation4], 128
    $region25: #{_qnetwork_forward.1} parent=1 // pred_fallthru
      _
    %320 = vsyncpa [#allocation3], 1
    %321 = vsyncpa [#allocation6], 1
    %322 = vsyncpa [#allocation4], 1

</llo_original>
